<compile_context>
chip_gen: v7x
topology: tpu7x:2x2x1
jax: 0.10.0
libtpu: 0.0.40
codegen_flags: <defaults>
</compile_context>

<pallas_src>
import jax
import jax.numpy as jnp
from jax.experimental import pallas as pl
from jax.experimental.pallas import tpu as pltpu

LANE = 128  # TPU lane width: output head padded to a multiple of this.


def actor_kernel(s_ref, w1_ref, b1_ref, w2_ref, b2_ref, w3_ref, b3_ref,
                 scale_ref, shift_ref, out_ref):
    """One batch tile of the actor MLP.

    s_ref:            (TM, state_dim)  bf16 batch tile
    w1/w2/w3_ref:     bf16 weights, [in, out] layout (VMEM-resident)
    b1/b2/b3_ref:     (1, out) f32 biases
    scale/shift_ref:  (1, OUT_P) f32 precomputed bound rescale rows
    out_ref:          (TM, OUT_P) f32 lane-dense (padded) output tile
    """
    # Layer 1: Linear(state_dim -> 256) + ReLU. bf16 MXU, f32 accumulate.
    a = jnp.dot(s_ref[...], w1_ref[...], preferred_element_type=jnp.float32)
    a = jnp.maximum(a + b1_ref[...], 0.0)
    # Layer 2: Linear(256 -> 256) + ReLU.
    a = jnp.dot(a.astype(jnp.bfloat16), w2_ref[...],
                preferred_element_type=jnp.float32)
    a = jnp.maximum(a + b2_ref[...], 0.0)
    # Layer 3: Linear(256 -> OUT_P), tanh squash, affine rescale to bounds.
    z = jnp.dot(a.astype(jnp.bfloat16), w3_ref[...],
                preferred_element_type=jnp.float32)
    z = z + b3_ref[...]
    out_ref[...] = scale_ref[...] * jnp.tanh(z) + shift_ref[...]


def actor_forward(state, params, action_dim, *, tm=128):
    """state: [B, state_dim] f32 -> action: [B, action_dim] f32."""
    w1, b1, w2, b2, w3, b3, scale, shift = params
    B, state_dim = state.shape
    out_p = w3.shape[1]  # lane-padded output width (multiple of 128)

    # Pad batch to a multiple of the batch tile so the grid covers it exactly.
    b_pad = pl.cdiv(B, tm) * tm
    if b_pad != B:
        state = jnp.pad(state, ((0, b_pad - B), (0, 0)))
    # bf16 activations into the MXU (halves state DMA too); epilogue stays f32.
    state = state.astype(jnp.bfloat16)

    # Constant index_map => weight/bias blocks stay resident across the grid.
    resident = lambda arr: pl.BlockSpec(arr.shape, lambda i: (0,) * arr.ndim)

    out = pl.pallas_call(
        actor_kernel,
        out_shape=jax.ShapeDtypeStruct((b_pad, out_p), jnp.float32),
        grid=(b_pad // tm,),
        in_specs=[
            pl.BlockSpec((tm, state_dim), lambda i: (i, 0)),  # batch tile
            resident(w1), resident(b1),
            resident(w2), resident(b2),
            resident(w3), resident(b3),
            resident(scale), resident(shift),
        ],
        out_specs=pl.BlockSpec((tm, out_p), lambda i: (i, 0)),
        compiler_params=pltpu.CompilerParams(
            dimension_semantics=("parallel",)),  # v7x: shard batch over 2 TCs
    )(state, w1, b1, w2, b2, w3, b3, scale, shift)

    return out[:B, :action_dim]


def init_params(key, state_dim, action_dim, max_action, min_action):
    """PyTorch-style (uniform fan_in) init. Weights are [in, out], bf16.

    The output head (w3/b3) and the bound scale/shift rows are zero-padded to
    a multiple of 128 lanes so the kernel's final store is lane-dense.
    """
    def linear_init(k, fan_in, fan_out):
        kw, kb = jax.random.split(k)
        bound = 1.0 / jnp.sqrt(jnp.float32(fan_in))
        w = jax.random.uniform(kw, (fan_in, fan_out), jnp.float32, -bound, bound)
        b = jax.random.uniform(kb, (1, fan_out), jnp.float32, -bound, bound)
        return w, b

    k1, k2, k3 = jax.random.split(key, 3)
    w1, b1 = linear_init(k1, state_dim, 256)
    w2, b2 = linear_init(k2, 256, 256)
    w3, b3 = linear_init(k3, 256, action_dim)

    out_p = pl.cdiv(action_dim, LANE) * LANE
    pad = out_p - action_dim
    w3 = jnp.pad(w3, ((0, 0), (0, pad)))
    b3 = jnp.pad(b3, ((0, 0), (0, pad)))

    amax = jnp.asarray(max_action, jnp.float32).reshape(1, action_dim)
    amin = jnp.asarray(min_action, jnp.float32).reshape(1, action_dim)
    scale = jnp.pad((amax - amin) * 0.5, ((0, 0), (0, pad)))
    shift = jnp.pad((amax + amin) * 0.5, ((0, 0), (0, pad)))

    # bf16 for the MXU path; biases / scale / shift stay f32 for the epilogue.
    w1 = w1.astype(jnp.bfloat16)
    w2 = w2.astype(jnp.bfloat16)
    w3 = w3.astype(jnp.bfloat16)
    return (w1, b1, w2, b2, w3, b3, scale, shift)


def actor_reference(state, params, action_dim):
    """Pure-JAX reference with the same (bf16-stored) parameters, f32 math."""
    w1, b1, w2, b2, w3, b3, scale, shift = params
    a = jnp.maximum(state @ w1.astype(jnp.float32) + b1, 0.0)
    a = jnp.maximum(a @ w2.astype(jnp.float32) + b2, 0.0)
    z = a @ w3.astype(jnp.float32) + b3
    return (scale * jnp.tanh(z) + shift)[:, :action_dim]


if __name__ == "__main__":
    state_dim = 16
    action_dim = 4
    batch = 8  # NOTE: batched >=128-row calls fill the MXU; small B is padded.

    key = jax.random.PRNGKey(0)
    k_params, k_state = jax.random.split(key)

    max_action = [2.0, 1.0, 3.0, 0.5]
    min_action = [-2.0, -1.0, -3.0, -0.5]
    params = init_params(k_params, state_dim, action_dim, max_action, min_action)

    state = jax.random.normal(k_state, (batch, state_dim), jnp.float32)

    action = actor_forward(state, params, action_dim)
    jax.block_until_ready(action)

    # Sanity 1: actions lie inside [min_action, max_action].
    amin = jnp.asarray(min_action)[None, :]
    amax = jnp.asarray(max_action)[None, :]
    assert action.shape == (batch, action_dim)
    assert bool(jnp.all(action >= amin - 1e-4)) and bool(jnp.all(action <= amax + 1e-4))

    # Sanity 2: matches a pure-JAX reference (bf16 MXU vs f32 => loose tol).
    ref = actor_reference(state, params, action_dim)
    assert bool(jnp.all(jnp.abs(action - ref) < 5e-2)), "mismatch vs reference"

    print("KERNEL_OK")
</pallas_src>

<mosaic_0001>
module attributes {stable_mosaic.version = 11 : i64} {
  func.func @actor_kernel(%arg0: i32, %arg1: memref<128x16xbf16, #tpu.memory_space<vmem>>, %arg2: memref<16x256xbf16, #tpu.memory_space<vmem>>, %arg3: memref<1x256xf32, #tpu.memory_space<vmem>>, %arg4: memref<256x256xbf16, #tpu.memory_space<vmem>>, %arg5: memref<1x256xf32, #tpu.memory_space<vmem>>, %arg6: memref<256x128xbf16, #tpu.memory_space<vmem>>, %arg7: memref<1x128xf32, #tpu.memory_space<vmem>>, %arg8: memref<1x128xf32, #tpu.memory_space<vmem>>, %arg9: memref<1x128xf32, #tpu.memory_space<vmem>>, %arg10: memref<128x128xf32, #tpu.memory_space<vmem>>) attributes {dimension_semantics = [#tpu.dimension_semantics<parallel>], iteration_bounds = array<i64: 1>, scalar_prefetch = 0 : i64, scratch_operands = 0 : i64, tpu.core_type = #tpu.core_type<tc>, window_params = [{transform_indices = @transform_0, window_bounds = array<i64: 128, 16>}, {pipeline_mode = #tpu.pipeline_mode<synchronous>, transform_indices = @transform_1, window_bounds = array<i64: 16, 256>}, {pipeline_mode = #tpu.pipeline_mode<synchronous>, transform_indices = @transform_2, window_bounds = array<i64: 1, 256>}, {pipeline_mode = #tpu.pipeline_mode<synchronous>, transform_indices = @transform_3, window_bounds = array<i64: 256, 256>}, {pipeline_mode = #tpu.pipeline_mode<synchronous>, transform_indices = @transform_4, window_bounds = array<i64: 1, 256>}, {pipeline_mode = #tpu.pipeline_mode<synchronous>, transform_indices = @transform_5, window_bounds = array<i64: 256, 128>}, {pipeline_mode = #tpu.pipeline_mode<synchronous>, transform_indices = @transform_6, window_bounds = array<i64: 1, 128>}, {pipeline_mode = #tpu.pipeline_mode<synchronous>, transform_indices = @transform_7, window_bounds = array<i64: 1, 128>}, {pipeline_mode = #tpu.pipeline_mode<synchronous>, transform_indices = @transform_8, window_bounds = array<i64: 1, 128>}, {transform_indices = @transform_9, window_bounds = array<i64: 128, 128>}]} {
    %c0 = arith.constant 0 : index
    %c0_0 = arith.constant 0 : index
    %0 = vector.load %arg1[%c0, %c0_0] : memref<128x16xbf16, #tpu.memory_space<vmem>>, vector<128x16xbf16>
    %c0_1 = arith.constant 0 : index
    %c0_2 = arith.constant 0 : index
    %1 = vector.load %arg2[%c0_1, %c0_2] : memref<16x256xbf16, #tpu.memory_space<vmem>>, vector<16x256xbf16>
    %cst = arith.constant dense<0.000000e+00> : vector<128x256xf32>
    %2 = tpu.matmul %0, %1, %cst {dimension_numbers = #tpu.dot_dimension_numbers<[1], [0], [0], [1], [0, 0, 1, 1], [], []>} : vector<128x16xbf16>, vector<16x256xbf16>, vector<128x256xf32> -> vector<128x256xf32>
    %c0_3 = arith.constant 0 : index
    %c0_4 = arith.constant 0 : index
    %3 = vector.load %arg3[%c0_3, %c0_4] : memref<1x256xf32, #tpu.memory_space<vmem>>, vector<1x256xf32>
    %4 = vector.broadcast %3 : vector<1x256xf32> to vector<128x256xf32>
    %5 = arith.addf %2, %4 : vector<128x256xf32>
    %cst_5 = arith.constant 0.000000e+00 : f32
    %6 = vector.broadcast %cst_5 : f32 to vector<128x256xf32>
    %7 = arith.maximumf %5, %6 : vector<128x256xf32>
    %8 = arith.truncf %7 : vector<128x256xf32> to vector<128x256xbf16>
    %c0_6 = arith.constant 0 : index
    %c0_7 = arith.constant 0 : index
    %9 = vector.load %arg4[%c0_6, %c0_7] : memref<256x256xbf16, #tpu.memory_space<vmem>>, vector<256x256xbf16>
    %cst_8 = arith.constant dense<0.000000e+00> : vector<128x256xf32>
    %10 = tpu.matmul %8, %9, %cst_8 {dimension_numbers = #tpu.dot_dimension_numbers<[1], [0], [0], [1], [0, 0, 1, 1], [], []>} : vector<128x256xbf16>, vector<256x256xbf16>, vector<128x256xf32> -> vector<128x256xf32>
    %c0_9 = arith.constant 0 : index
    %c0_10 = arith.constant 0 : index
    %11 = vector.load %arg5[%c0_9, %c0_10] : memref<1x256xf32, #tpu.memory_space<vmem>>, vector<1x256xf32>
    %12 = vector.broadcast %11 : vector<1x256xf32> to vector<128x256xf32>
    %13 = arith.addf %10, %12 : vector<128x256xf32>
    %cst_11 = arith.constant 0.000000e+00 : f32
    %14 = vector.broadcast %cst_11 : f32 to vector<128x256xf32>
    %15 = arith.maximumf %13, %14 : vector<128x256xf32>
    %16 = arith.truncf %15 : vector<128x256xf32> to vector<128x256xbf16>
    %c0_12 = arith.constant 0 : index
    %c0_13 = arith.constant 0 : index
    %17 = vector.load %arg6[%c0_12, %c0_13] : memref<256x128xbf16, #tpu.memory_space<vmem>>, vector<256x128xbf16>
    %cst_14 = arith.constant dense<0.000000e+00> : vector<128x128xf32>
    %18 = tpu.matmul %16, %17, %cst_14 {dimension_numbers = #tpu.dot_dimension_numbers<[1], [0], [0], [1], [0, 0, 1, 1], [], []>} : vector<128x256xbf16>, vector<256x128xbf16>, vector<128x128xf32> -> vector<128x128xf32>
    %c0_15 = arith.constant 0 : index
    %c0_16 = arith.constant 0 : index
    %19 = vector.load %arg7[%c0_15, %c0_16] : memref<1x128xf32, #tpu.memory_space<vmem>>, vector<1x128xf32>
    %20 = vector.broadcast %19 : vector<1x128xf32> to vector<128x128xf32>
    %21 = arith.addf %18, %20 : vector<128x128xf32>
    %c0_17 = arith.constant 0 : index
    %c0_18 = arith.constant 0 : index
    %22 = vector.load %arg8[%c0_17, %c0_18] : memref<1x128xf32, #tpu.memory_space<vmem>>, vector<1x128xf32>
    %23 = math.tanh %21 : vector<128x128xf32>
    %24 = vector.broadcast %22 : vector<1x128xf32> to vector<128x128xf32>
    %25 = arith.mulf %24, %23 : vector<128x128xf32>
    %c0_19 = arith.constant 0 : index
    %c0_20 = arith.constant 0 : index
    %26 = vector.load %arg9[%c0_19, %c0_20] : memref<1x128xf32, #tpu.memory_space<vmem>>, vector<1x128xf32>
    %27 = vector.broadcast %26 : vector<1x128xf32> to vector<128x128xf32>
    %28 = arith.addf %25, %27 : vector<128x128xf32>
    %c0_21 = arith.constant 0 : index
    %c0_22 = arith.constant 0 : index
    %29 = vector.load %arg10[%c0_21, %c0_22] : memref<128x128xf32, #tpu.memory_space<vmem>>, vector<128x128xf32>
    tpu.vector_store %arg10[%c0_21, %c0_22], %28 {strides = array<i32>} : memref<128x128xf32, #tpu.memory_space<vmem>>, vector<128x128xf32>,
    return
  }
  func.func @transform_0(%arg0: i32) -> (i32, i32) {
    %c0_i32 = arith.constant 0 : i32
    %c0_i32_0 = arith.constant 0 : i32
    return %arg0, %c0_i32 : i32, i32
  }
  func.func @transform_1(%arg0: i32) -> (i32, i32) {
    %c0_i32 = arith.constant 0 : i32
    %c0_i32_0 = arith.constant 0 : i32
    %c0_i32_1 = arith.constant 0 : i32
    return %c0_i32, %c0_i32_0 : i32, i32
  }
  func.func @transform_2(%arg0: i32) -> (i32, i32) {
    %c0_i32 = arith.constant 0 : i32
    %c0_i32_0 = arith.constant 0 : i32
    %c0_i32_1 = arith.constant 0 : i32
    return %c0_i32, %c0_i32_0 : i32, i32
  }
  func.func @transform_3(%arg0: i32) -> (i32, i32) {
    %c0_i32 = arith.constant 0 : i32
    %c0_i32_0 = arith.constant 0 : i32
    %c0_i32_1 = arith.constant 0 : i32
    return %c0_i32, %c0_i32_0 : i32, i32
  }
  func.func @transform_4(%arg0: i32) -> (i32, i32) {
    %c0_i32 = arith.constant 0 : i32
    %c0_i32_0 = arith.constant 0 : i32
    %c0_i32_1 = arith.constant 0 : i32
    return %c0_i32, %c0_i32_0 : i32, i32
  }
  func.func @transform_5(%arg0: i32) -> (i32, i32) {
    %c0_i32 = arith.constant 0 : i32
    %c0_i32_0 = arith.constant 0 : i32
    %c0_i32_1 = arith.constant 0 : i32
    return %c0_i32, %c0_i32_0 : i32, i32
  }
  func.func @transform_6(%arg0: i32) -> (i32, i32) {
    %c0_i32 = arith.constant 0 : i32
    %c0_i32_0 = arith.constant 0 : i32
    %c0_i32_1 = arith.constant 0 : i32
    return %c0_i32, %c0_i32_0 : i32, i32
  }
  func.func @transform_7(%arg0: i32) -> (i32, i32) {
    %c0_i32 = arith.constant 0 : i32
    %c0_i32_0 = arith.constant 0 : i32
    %c0_i32_1 = arith.constant 0 : i32
    return %c0_i32, %c0_i32_0 : i32, i32
  }
  func.func @transform_8(%arg0: i32) -> (i32, i32) {
    %c0_i32 = arith.constant 0 : i32
    %c0_i32_0 = arith.constant 0 : i32
    %c0_i32_1 = arith.constant 0 : i32
    return %c0_i32, %c0_i32_0 : i32, i32
  }
  func.func @transform_9(%arg0: i32) -> (i32, i32) {
    %c0_i32 = arith.constant 0 : i32
    %c0_i32_0 = arith.constant 0 : i32
    return %arg0, %c0_i32 : i32, i32
  }
}

</mosaic_0001>

<llo_original>
// kernel: tpu_custom_call.1
$region0: #{tpu_custom_call.1}
  #allocation0 [shape = 'u32[]', space=smem, size = 0x4, offset = 0x4, fixed_abs, tag = 'smem constant byte address 0x4 - core index']
  #allocation1 [shape = 'u32[144,128]{1,0:T(1,128)}', space=vmem, size = 0x12000, scoped, tag = 'internal scratch']
  %s0 = inlined_call_operand.vmem [shape: bf16[128,16], index: 0, kind: input, shape index: {}]
  %s1 = inlined_call_operand.vmem [shape: bf16[16,256], index: 1, kind: input, shape index: {}]
  %s2 = inlined_call_operand.vmem [shape: f32[1,256], index: 2, kind: input, shape index: {}]
  %s3 = inlined_call_operand.hbm [shape: bf16[256,256], index: 3, kind: input, shape index: {}]
  %s4 = inlined_call_operand.vmem [shape: f32[1,256], index: 4, kind: input, shape index: {}]
  %s5 = inlined_call_operand.hbm [shape: bf16[256,128], index: 5, kind: input, shape index: {}]
  %s6 = inlined_call_operand.vmem [shape: f32[1,128], index: 6, kind: input, shape index: {}]
  %s7 = inlined_call_operand.vmem [shape: f32[1,128], index: 7, kind: input, shape index: {}]
  %s8 = inlined_call_operand.vmem [shape: f32[1,128], index: 8, kind: input, shape index: {}]
  %s9 = inlined_call_operand.hbm [shape: f32[128,128], index: 9, kind: output, shape index: {}]
  %s10 = sld [smem:[#allocation0]]
  $region54: #{tpu_custom_call.1} parent=0
    _
  %s12 = ssub.s32 1, %s10
  %s13 = scalar_select 0, %s12, %s10
  $region1: #{tpu_custom_call.1} parent=0
    #allocation2 [shape = 'u8[131072]{0}', space=vmem, size = 0x20000, scoped, tag = 'input window, operand 3, single buffered']
    #allocation3 [shape = 's32[1]{0}', space=sflag, size = 0x4, scoped, tag = 'scoped memory for tpu_custom_call.1']
    #allocation4 [shape = 's32[1]{0}', space=sflag, size = 0x4, scoped, tag = 'scoped memory for tpu_custom_call.1']
    #allocation5 [shape = 'u8[65536]{0}', space=vmem, size = 0x10000, scoped, tag = 'input window, operand 5, single buffered']
    #allocation6 [shape = 's32[1]{0}', space=sflag, size = 0x4, scoped, tag = 'scoped memory for tpu_custom_call.1']
    #allocation7 [shape = 'u8[65536]{0}', space=vmem, size = 0x10000, scoped, tag = 'output window, operand 0, single buffered']
    %14 = vsyncpa [#allocation3], 0
    %15 = vsyncpa [#allocation6], 0
    %16 = vsyncpa [#allocation4], 0
    // Predicated region
    $region2: #{tpu_custom_call.1} parent=1 // pred_check
      _
    $region3: #{tpu_custom_call.1} parent=1 // pred_check_branch
      %18 = sbr.rel (0) target = $region5
    $region4: #{tpu_custom_call.1} parent=1 // pred_region
      _
    $region5: #{tpu_custom_call.1} parent=1 // pred_fallthru
      _
    // Predicated region
    $region6: #{tpu_custom_call.1} parent=1 // pred_check
      _
    $region7: #{tpu_custom_call.1} parent=1 // pred_check_branch
      %20 = sbr.rel (0) target = $region9
    $region8: #{tpu_custom_call.1} parent=1 // pred_region
      _
    $region9: #{tpu_custom_call.1} parent=1 // pred_fallthru
      _
    // Predicated region
    $region10: #{tpu_custom_call.1} parent=1 // pred_check
      _
    $region11: #{tpu_custom_call.1} parent=1 // pred_check_branch
      %22 = sbr.rel (0) target = $region13
    $region12: #{tpu_custom_call.1} parent=1 // pred_region
      _
    $region13: #{tpu_custom_call.1} parent=1 // pred_fallthru
      _
    // Predicated region
    $region14: #{tpu_custom_call.1} parent=1 // pred_check
      _
    $region15: #{tpu_custom_call.1} parent=1 // pred_check_branch
      %24 = sbr.rel (0) target = $region17
    $region16: #{tpu_custom_call.1} parent=1 // pred_region
      %s26 = ssub.s32 4096, 4096
      %27 = vsyncadd [#allocation3], %s26
      %s28 = sshll.u32 [#allocation2], 4
      %s29 = int_to_ptr.vmem [resolvable:$true] %s28
      %34 = dma.hbm_to_vmem [thread:$0]  %s3, 4096, %s29, [#allocation3], 128, 128, 8
    $region17: #{tpu_custom_call.1} parent=1 // pred_fallthru
      _
    // Predicated region
    $region18: #{tpu_custom_call.1} parent=1 // pred_check
      _
    $region19: #{tpu_custom_call.1} parent=1 // pred_check_branch
      %36 = sbr.rel (0) target = $region21
    $region20: #{tpu_custom_call.1} parent=1 // pred_region
      _
    $region21: #{tpu_custom_call.1} parent=1 // pred_fallthru
      _
    // Predicated region
    $region22: #{tpu_custom_call.1} parent=1 // pred_check
      _
    $region23: #{tpu_custom_call.1} parent=1 // pred_check_branch
      %38 = sbr.rel (0) target = $region25
    $region24: #{tpu_custom_call.1} parent=1 // pred_region
      %s40 = ssub.s32 2048, 2048
      %41 = vsyncadd [#allocation6], %s40
      %s42 = sshll.u32 [#allocation5], 4
      %s43 = int_to_ptr.vmem [resolvable:$true] %s42
      %48 = dma.hbm_to_vmem [thread:$0]  %s5, 2048, %s43, [#allocation6], 64, 64, 4
    $region25: #{tpu_custom_call.1} parent=1 // pred_fallthru
      _
    // Predicated region
    $region26: #{tpu_custom_call.1} parent=1 // pred_check
      _
    $region27: #{tpu_custom_call.1} parent=1 // pred_check_branch
      %50 = sbr.rel (0) target = $region29
    $region28: #{tpu_custom_call.1} parent=1 // pred_region
      _
    $region29: #{tpu_custom_call.1} parent=1 // pred_fallthru
      _
    // Predicated region
    $region30: #{tpu_custom_call.1} parent=1 // pred_check
      _
    $region31: #{tpu_custom_call.1} parent=1 // pred_check_branch
      %52 = sbr.rel (0) target = $region33
    $region32: #{tpu_custom_call.1} parent=1 // pred_region
      _
    $region33: #{tpu_custom_call.1} parent=1 // pred_fallthru
      _
    // Predicated region
    $region34: #{tpu_custom_call.1} parent=1 // pred_check
      _
    $region35: #{tpu_custom_call.1} parent=1 // pred_check_branch
      %54 = sbr.rel (0) target = $region37
    $region36: #{tpu_custom_call.1} parent=1 // pred_region
      _
    $region37: #{tpu_custom_call.1} parent=1 // pred_fallthru
      _
    // Predicated region
    $region38: #{tpu_custom_call.1} parent=1 // pred_check
      _
    $region39: #{tpu_custom_call.1} parent=1 // pred_check_branch
      %56 = sbr.rel (0) target = $region41
    $region40: #{tpu_custom_call.1} parent=1 // pred_region
      %57 = dma.done [#allocation3], 4096
    $region41: #{tpu_custom_call.1} parent=1 // pred_fallthru
      _
    // Predicated region
    $region42: #{tpu_custom_call.1} parent=1 // pred_check
      _
    $region43: #{tpu_custom_call.1} parent=1 // pred_check_branch
      %59 = sbr.rel (0) target = $region45
    $region44: #{tpu_custom_call.1} parent=1 // pred_region
      %60 = dma.done [#allocation6], 2048
    $region45: #{tpu_custom_call.1} parent=1 // pred_fallthru
      _
    %v62 = vld [vmem:[%s0] sm:$0xf]
    %v63 = vld [vmem:[%s0 + $0x4] sm:$0xf]
    %v64 = vld [vmem:[%s0 + $0x8] sm:$0xf]
    %v65 = vld [vmem:[%s0 + $0xc] sm:$0xf]
    %v66 = vld [vmem:[%s0 + $0x10] sm:$0xf]
    %v67 = vld [vmem:[%s0 + $0x14] sm:$0xf]
    %v68 = vld [vmem:[%s0 + $0x18] sm:$0xf]
    %v69 = vld [vmem:[%s0 + $0x1c] sm:$0xf]
    %v70 = vld [vmem:[%s0 + $0x20] sm:$0xf]
    %v71 = vld [vmem:[%s0 + $0x24] sm:$0xf]
    %v72 = vld [vmem:[%s0 + $0x28] sm:$0xf]
    %v73 = vld [vmem:[%s0 + $0x2c] sm:$0xf]
    %v74 = vld [vmem:[%s0 + $0x30] sm:$0xf]
    %v75 = vld [vmem:[%s0 + $0x34] sm:$0xf]
    %v76 = vld [vmem:[%s0 + $0x38] sm:$0xf]
    %v77 = vld [vmem:[%s0 + $0x3c] sm:$0xf]
    %v78 = vld [vmem:[%s1] sm:$0xff]
    %v79 = vld [vmem:[%s1 + $0x8] sm:$0xff]
    %v80 = vld [vmem:[%s2] sm:$0x3]
    %v82 = vlaneseq
    %v83 = vshrl.u32 %v82, 7
    %v84 = vsub.s32 0, %v83
    %v85 = vrot.slane %v80, %v84
    %v86 = vlaneseq
    %v87 = vshrl.u32 %v86, 7
    %v88 = vsub.s32 1, %v87
    %v89 = vrot.slane %v80, %v88
    %v108 = vunpack.c.l.b16 %v62
    %v109 = vunpack.c.l.b16 %v63
    %v110 = vunpack.c.l.b16 %v64
    %v111 = vunpack.c.l.b16 %v65
    %v112 = vunpack.c.l.b16 %v66
    %v113 = vunpack.c.l.b16 %v67
    %v114 = vunpack.c.l.b16 %v68
    %v115 = vunpack.c.l.b16 %v69
    %v116 = vunpack.c.l.b16 %v70
    %v117 = vunpack.c.l.b16 %v71
    %v118 = vunpack.c.l.b16 %v72
    %v119 = vunpack.c.l.b16 %v73
    %v120 = vunpack.c.l.b16 %v74
    %v121 = vunpack.c.l.b16 %v75
    %v122 = vunpack.c.l.b16 %v76
    %v123 = vunpack.c.l.b16 %v77
    %v124 = vpack.c.b16 %v109, %v108
    %v125 = vpack.c.b16 %v111, %v110
    %v126 = vpack.c.b16 %v113, %v112
    %v127 = vpack.c.b16 %v115, %v114
    %v128 = vpack.c.b16 %v117, %v116
    %v129 = vpack.c.b16 %v119, %v118
    %v130 = vpack.c.b16 %v121, %v120
    %v131 = vpack.c.b16 %v123, %v122
    %v134 = vunpack.c.l.b16 %v78
    %v135 = vunpack.c.h.b16 %v78
    %v136 = vunpack.c.l.b16 %v79
    %v137 = vunpack.c.h.b16 %v79
    %v138 = vpack.c.b16 %v136, %v134
    %v139 = vpack.c.b16 %v137, %v135
    %vm142 = vcmask 130048
    %v144 = vsel %vm142, %v124, 0
    %v147 = vsel %vm142, %v125, 0
    %v150 = vsel %vm142, %v126, 0
    %v153 = vsel %vm142, %v127, 0
    %v156 = vsel %vm142, %v128, 0
    %v159 = vsel %vm142, %v129, 0
    %v162 = vsel %vm142, %v130, 0
    %v165 = vsel %vm142, %v131, 0
    %167 = vmatprep.subr.bf16.mxu0 %v139
    %168 = vmatpush1.bf16.msra.mxu0 %v138
    %169 = vmatprep.subr.bf16.mxu0 0
    %170 = vmatpush1.bf16.msra.mxu0 0
    %171 = vmatprep.subr.bf16.mxu0 0
    %172 = vmatpush1.bf16.msra.mxu0 0
    %173 = vmatprep.subr.bf16.mxu0 0
    %174 = vmatpush1.bf16.msra.mxu0 0
    %175 = vmatprep.subr.bf16.mxu0 0
    %176 = vmatpush1.bf16.msra.mxu0 0
    %177 = vmatprep.subr.bf16.mxu0 0
    %178 = vmatpush1.bf16.msra.mxu0 0
    %179 = vmatprep.subr.bf16.mxu0 0
    %180 = vmatpush1.bf16.msra.mxu0 0
    %181 = vmatprep.subr.bf16.mxu0 0
    %182 = vmatpush1.bf16.msra.mxu0 0
    %183 = vmatprep.subr.bf16.mxu0 0
    %184 = vmatpush1.bf16.msra.mxu0 0
    %185 = vmatprep.subr.bf16.mxu0 0
    %186 = vmatpush1.bf16.msra.mxu0 0
    %187 = vmatprep.subr.bf16.mxu0 0
    %188 = vmatpush1.bf16.msra.mxu0 0
    %189 = vmatprep.subr.bf16.mxu0 0
    %190 = vmatpush1.bf16.msra.mxu0 0
    %191 = vmatprep.subr.bf16.mxu0 0
    %192 = vmatpush1.bf16.msra.mxu0 0
    %193 = vmatprep.subr.bf16.mxu0 0
    %194 = vmatpush1.bf16.msra.mxu0 0
    %195 = vmatprep.subr.bf16.mxu0 0
    %196 = vmatpush1.bf16.msra.mxu0 0
    %197 = vmatprep.subr.bf16.mxu0 0
    %198 = vmatpush1.bf16.msra.mxu0 0
    %199 = vmatprep.mubr.bf16.mxu0 0
    %200 = vmatmul.mubr.bf16.gmra.mrb[0].mxu0 %v144
    %v201 = vpop.f32.mrb[0].mxu0
    %v202 = vadd.f32 %v85, %v201
    %v203 = vpop.f32.mrb[0].mxu0
    %v204 = vadd.f32 %v89, %v203
    %v205 = vpop.f32.mrb[0].mxu0
    %v206 = vadd.f32 %v85, %v205
    %v207 = vpop.f32.mrb[0].mxu0
    %v208 = vadd.f32 %v89, %v207
    %209 = vmatprep.mubr.bf16.mxu0 0
    %210 = vmatmul.mubr.bf16.gmra.mrb[0].mxu0 %v147
    %v211 = vpop.f32.mrb[0].mxu0
    %v212 = vadd.f32 %v85, %v211
    %v213 = vpop.f32.mrb[0].mxu0
    %v214 = vadd.f32 %v89, %v213
    %v215 = vpop.f32.mrb[0].mxu0
    %v216 = vadd.f32 %v85, %v215
    %v217 = vpop.f32.mrb[0].mxu0
    %v218 = vadd.f32 %v89, %v217
    %219 = vmatprep.mubr.bf16.mxu0 0
    %220 = vmatmul.mubr.bf16.gmra.mrb[0].mxu0 %v150
    %v221 = vpop.f32.mrb[0].mxu0
    %v222 = vadd.f32 %v85, %v221
    %v223 = vpop.f32.mrb[0].mxu0
    %v224 = vadd.f32 %v89, %v223
    %v225 = vpop.f32.mrb[0].mxu0
    %v226 = vadd.f32 %v85, %v225
    %v227 = vpop.f32.mrb[0].mxu0
    %v228 = vadd.f32 %v89, %v227
    %229 = vmatprep.mubr.bf16.mxu0 0
    %230 = vmatmul.mubr.bf16.gmra.mrb[0].mxu0 %v153
    %v231 = vpop.f32.mrb[0].mxu0
    %v232 = vadd.f32 %v85, %v231
    %v233 = vpop.f32.mrb[0].mxu0
    %v234 = vadd.f32 %v89, %v233
    %v235 = vpop.f32.mrb[0].mxu0
    %v236 = vadd.f32 %v85, %v235
    %v237 = vpop.f32.mrb[0].mxu0
    %v238 = vadd.f32 %v89, %v237
    %239 = vmatprep.mubr.bf16.mxu0 0
    %240 = vmatmul.mubr.bf16.gmra.mrb[0].mxu0 %v156
    %v241 = vpop.f32.mrb[0].mxu0
    %v242 = vadd.f32 %v85, %v241
    %v243 = vpop.f32.mrb[0].mxu0
    %v244 = vadd.f32 %v89, %v243
    %v245 = vpop.f32.mrb[0].mxu0
    %v246 = vadd.f32 %v85, %v245
    %v247 = vpop.f32.mrb[0].mxu0
    %v248 = vadd.f32 %v89, %v247
    %249 = vmatprep.mubr.bf16.mxu0 0
    %250 = vmatmul.mubr.bf16.gmra.mrb[0].mxu0 %v159
    %v251 = vpop.f32.mrb[0].mxu0
    %v252 = vadd.f32 %v85, %v251
    %v253 = vpop.f32.mrb[0].mxu0
    %v254 = vadd.f32 %v89, %v253
    %v255 = vpop.f32.mrb[0].mxu0
    %v256 = vadd.f32 %v85, %v255
    %v257 = vpop.f32.mrb[0].mxu0
    %v258 = vadd.f32 %v89, %v257
    %259 = vmatprep.mubr.bf16.mxu0 0
    %260 = vmatmul.mubr.bf16.gmra.mrb[0].mxu0 %v162
    %v261 = vpop.f32.mrb[0].mxu0
    %v262 = vadd.f32 %v85, %v261
    %v263 = vpop.f32.mrb[0].mxu0
    %v264 = vadd.f32 %v89, %v263
    %v265 = vpop.f32.mrb[0].mxu0
    %v266 = vadd.f32 %v85, %v265
    %v267 = vpop.f32.mrb[0].mxu0
    %v268 = vadd.f32 %v89, %v267
    %269 = vmatprep.mubr.bf16.mxu0 0
    %270 = vmatmul.mubr.bf16.gmra.mrb[0].mxu0 %v165
    %v271 = vpop.f32.mrb[0].mxu0
    %v272 = vadd.f32 %v85, %v271
    %v273 = vpop.f32.mrb[0].mxu0
    %v274 = vadd.f32 %v89, %v273
    %v275 = vpop.f32.mrb[0].mxu0
    %v276 = vadd.f32 %v85, %v275
    %v277 = vpop.f32.mrb[0].mxu0
    %v278 = vadd.f32 %v89, %v277
    %279 = vdwg.mxu0
    %v280 = vmax.f32 %v202, 0.0
    %v281 = vmax.f32 %v204, 0.0
    %v282 = vmax.f32 %v206, 0.0
    %v283 = vmax.f32 %v208, 0.0
    %v284 = vmax.f32 %v212, 0.0
    %v285 = vmax.f32 %v214, 0.0
    %v286 = vmax.f32 %v216, 0.0
    %v287 = vmax.f32 %v218, 0.0
    %v288 = vmax.f32 %v222, 0.0
    %v289 = vmax.f32 %v224, 0.0
    %v290 = vmax.f32 %v226, 0.0
    %v291 = vmax.f32 %v228, 0.0
    %v292 = vmax.f32 %v232, 0.0
    %v293 = vmax.f32 %v234, 0.0
    %v294 = vmax.f32 %v236, 0.0
    %v295 = vmax.f32 %v238, 0.0
    %v296 = vmax.f32 %v242, 0.0
    %v297 = vmax.f32 %v244, 0.0
    %v298 = vmax.f32 %v246, 0.0
    %v299 = vmax.f32 %v248, 0.0
    %v300 = vmax.f32 %v252, 0.0
    %v301 = vmax.f32 %v254, 0.0
    %v302 = vmax.f32 %v256, 0.0
    %v303 = vmax.f32 %v258, 0.0
    %v304 = vmax.f32 %v262, 0.0
    %v305 = vmax.f32 %v264, 0.0
    %v306 = vmax.f32 %v266, 0.0
    %v307 = vmax.f32 %v268, 0.0
    %v308 = vmax.f32 %v272, 0.0
    %v309 = vmax.f32 %v274, 0.0
    %v310 = vmax.f32 %v276, 0.0
    %v311 = vmax.f32 %v278, 0.0
    %v312 = vpack.c.bf16 %v282, %v280
    %v313 = vpack.c.bf16 %v283, %v281
    %v314 = vpack.c.bf16 %v286, %v284
    %v315 = vpack.c.bf16 %v287, %v285
    %v316 = vpack.c.bf16 %v290, %v288
    %v317 = vpack.c.bf16 %v291, %v289
    %v318 = vpack.c.bf16 %v294, %v292
    %v319 = vpack.c.bf16 %v295, %v293
    %v320 = vpack.c.bf16 %v298, %v296
    %v321 = vpack.c.bf16 %v299, %v297
    %v322 = vpack.c.bf16 %v302, %v300
    %v323 = vpack.c.bf16 %v303, %v301
    %v324 = vpack.c.bf16 %v306, %v304
    %v325 = vpack.c.bf16 %v307, %v305
    %v326 = vpack.c.bf16 %v310, %v308
    %v327 = vpack.c.bf16 %v311, %v309
    %v328 = vld [vmem:[#allocation2] sm:$0xff]
    %v329 = vld [vmem:[#allocation2 + $0x8] sm:$0xff]
    %v330 = vld [vmem:[#allocation2 + $0x10] sm:$0xff]
    %v331 = vld [vmem:[#allocation2 + $0x18] sm:$0xff]
    %v332 = vld [vmem:[#allocation2 + $0x20] sm:$0xff]
    %v333 = vld [vmem:[#allocation2 + $0x28] sm:$0xff]
    %v334 = vld [vmem:[#allocation2 + $0x30] sm:$0xff]
    %v335 = vld [vmem:[#allocation2 + $0x38] sm:$0xff]
    %v336 = vld [vmem:[#allocation2 + $0x40] sm:$0xff]
    %v337 = vld [vmem:[#allocation2 + $0x48] sm:$0xff]
    %v338 = vld [vmem:[#allocation2 + $0x50] sm:$0xff]
    %v339 = vld [vmem:[#allocation2 + $0x58] sm:$0xff]
    %v340 = vld [vmem:[#allocation2 + $0x60] sm:$0xff]
    %v341 = vld [vmem:[#allocation2 + $0x68] sm:$0xff]
    %v342 = vld [vmem:[#allocation2 + $0x70] sm:$0xff]
    %v343 = vld [vmem:[#allocation2 + $0x78] sm:$0xff]
    %v344 = vld [vmem:[#allocation2 + $0x80] sm:$0xff]
    %v345 = vld [vmem:[#allocation2 + $0x88] sm:$0xff]
    %v346 = vld [vmem:[#allocation2 + $0x90] sm:$0xff]
    %v347 = vld [vmem:[#allocation2 + $0x98] sm:$0xff]
    %v348 = vld [vmem:[#allocation2 + $0xa0] sm:$0xff]
    %v349 = vld [vmem:[#allocation2 + $0xa8] sm:$0xff]
    %v350 = vld [vmem:[#allocation2 + $0xb0] sm:$0xff]
    %v351 = vld [vmem:[#allocation2 + $0xb8] sm:$0xff]
    %v352 = vld [vmem:[#allocation2 + $0xc0] sm:$0xff]
    %v353 = vld [vmem:[#allocation2 + $0xc8] sm:$0xff]
    %v354 = vld [vmem:[#allocation2 + $0xd0] sm:$0xff]
    %v355 = vld [vmem:[#allocation2 + $0xd8] sm:$0xff]
    %v356 = vld [vmem:[#allocation2 + $0xe0] sm:$0xff]
    %v357 = vld [vmem:[#allocation2 + $0xe8] sm:$0xff]
    %v358 = vld [vmem:[#allocation2 + $0xf0] sm:$0xff]
    %v359 = vld [vmem:[#allocation2 + $0xf8] sm:$0xff]
    %v360 = vld [vmem:[%s4] sm:$0x3]
    %v362 = vlaneseq
    %v363 = vshrl.u32 %v362, 7
    %v364 = vsub.s32 0, %v363
    %v365 = vrot.slane %v360, %v364
    %v366 = vlaneseq
    %v367 = vshrl.u32 %v366, 7
    %v368 = vsub.s32 1, %v367
    %v369 = vrot.slane %v360, %v368
    %v404 = vunpack.c.l.b16 %v328
    %v405 = vunpack.c.h.b16 %v328
    %v406 = vunpack.c.l.b16 %v329
    %v407 = vunpack.c.h.b16 %v329
    %v408 = vunpack.c.l.b16 %v330
    %v409 = vunpack.c.h.b16 %v330
    %v410 = vunpack.c.l.b16 %v331
    %v411 = vunpack.c.h.b16 %v331
    %v412 = vunpack.c.l.b16 %v332
    %v413 = vunpack.c.h.b16 %v332
    %v414 = vunpack.c.l.b16 %v333
    %v415 = vunpack.c.h.b16 %v333
    %v416 = vunpack.c.l.b16 %v334
    %v417 = vunpack.c.h.b16 %v334
    %v418 = vunpack.c.l.b16 %v335
    %v419 = vunpack.c.h.b16 %v335
    %v420 = vunpack.c.l.b16 %v336
    %v421 = vunpack.c.h.b16 %v336
    %v422 = vunpack.c.l.b16 %v337
    %v423 = vunpack.c.h.b16 %v337
    %v424 = vunpack.c.l.b16 %v338
    %v425 = vunpack.c.h.b16 %v338
    %v426 = vunpack.c.l.b16 %v339
    %v427 = vunpack.c.h.b16 %v339
    %v428 = vunpack.c.l.b16 %v340
    %v429 = vunpack.c.h.b16 %v340
    %v430 = vunpack.c.l.b16 %v341
    %v431 = vunpack.c.h.b16 %v341
    %v432 = vunpack.c.l.b16 %v342
    %v433 = vunpack.c.h.b16 %v342
    %v434 = vunpack.c.l.b16 %v343
    %v435 = vunpack.c.h.b16 %v343
    %v436 = vunpack.c.l.b16 %v344
    %v437 = vunpack.c.h.b16 %v344
    %v438 = vunpack.c.l.b16 %v345
    %v439 = vunpack.c.h.b16 %v345
    %v440 = vunpack.c.l.b16 %v346
    %v441 = vunpack.c.h.b16 %v346
    %v442 = vunpack.c.l.b16 %v347
    %v443 = vunpack.c.h.b16 %v347
    %v444 = vunpack.c.l.b16 %v348
    %v445 = vunpack.c.h.b16 %v348
    %v446 = vunpack.c.l.b16 %v349
    %v447 = vunpack.c.h.b16 %v349
    %v448 = vunpack.c.l.b16 %v350
    %v449 = vunpack.c.h.b16 %v350
    %v450 = vunpack.c.l.b16 %v351
    %v451 = vunpack.c.h.b16 %v351
    %v452 = vunpack.c.l.b16 %v352
    %v453 = vunpack.c.h.b16 %v352
    %v454 = vunpack.c.l.b16 %v353
    %v455 = vunpack.c.h.b16 %v353
    %v456 = vunpack.c.l.b16 %v354
    %v457 = vunpack.c.h.b16 %v354
    %v458 = vunpack.c.l.b16 %v355
    %v459 = vunpack.c.h.b16 %v355
    %v460 = vunpack.c.l.b16 %v356
    %v461 = vunpack.c.h.b16 %v356
    %v462 = vunpack.c.l.b16 %v357
    %v463 = vunpack.c.h.b16 %v357
    %v464 = vunpack.c.l.b16 %v358
    %v465 = vunpack.c.h.b16 %v358
    %v466 = vunpack.c.l.b16 %v359
    %v467 = vunpack.c.h.b16 %v359
    %v468 = vpack.c.b16 %v406, %v404
    %v469 = vpack.c.b16 %v407, %v405
    %v470 = vpack.c.b16 %v410, %v408
    %v471 = vpack.c.b16 %v411, %v409
    %v472 = vpack.c.b16 %v414, %v412
    %v473 = vpack.c.b16 %v415, %v413
    %v474 = vpack.c.b16 %v418, %v416
    %v475 = vpack.c.b16 %v419, %v417
    %v476 = vpack.c.b16 %v422, %v420
    %v477 = vpack.c.b16 %v423, %v421
    %v478 = vpack.c.b16 %v426, %v424
    %v479 = vpack.c.b16 %v427, %v425
    %v480 = vpack.c.b16 %v430, %v428
    %v481 = vpack.c.b16 %v431, %v429
    %v482 = vpack.c.b16 %v434, %v432
    %v483 = vpack.c.b16 %v435, %v433
    %v484 = vpack.c.b16 %v438, %v436
    %v485 = vpack.c.b16 %v439, %v437
    %v486 = vpack.c.b16 %v442, %v440
    %v487 = vpack.c.b16 %v443, %v441
    %v488 = vpack.c.b16 %v446, %v444
    %v489 = vpack.c.b16 %v447, %v445
    %v490 = vpack.c.b16 %v450, %v448
    %v491 = vpack.c.b16 %v451, %v449
    %v492 = vpack.c.b16 %v454, %v452
    %v493 = vpack.c.b16 %v455, %v453
    %v494 = vpack.c.b16 %v458, %v456
    %v495 = vpack.c.b16 %v459, %v457
    %v496 = vpack.c.b16 %v462, %v460
    %v497 = vpack.c.b16 %v463, %v461
    %v498 = vpack.c.b16 %v466, %v464
    %v499 = vpack.c.b16 %v467, %v465
    %532 = vmatprep.subr.bf16.mxu0 %v469
    %533 = vmatpush1.bf16.msra.mxu0 %v468
    %534 = vmatprep.subr.bf16.mxu0 %v471
    %535 = vmatpush1.bf16.msra.mxu0 %v470
    %536 = vmatprep.subr.bf16.mxu0 %v473
    %537 = vmatpush1.bf16.msra.mxu0 %v472
    %538 = vmatprep.subr.bf16.mxu0 %v475
    %539 = vmatpush1.bf16.msra.mxu0 %v474
    %540 = vmatprep.subr.bf16.mxu0 %v477
    %541 = vmatpush1.bf16.msra.mxu0 %v476
    %542 = vmatprep.subr.bf16.mxu0 %v479
    %543 = vmatpush1.bf16.msra.mxu0 %v478
    %544 = vmatprep.subr.bf16.mxu0 %v481
    %545 = vmatpush1.bf16.msra.mxu0 %v480
    %546 = vmatprep.subr.bf16.mxu0 %v483
    %547 = vmatpush1.bf16.msra.mxu0 %v482
    %548 = vmatprep.subr.bf16.mxu0 %v485
    %549 = vmatpush1.bf16.msra.mxu0 %v484
    %550 = vmatprep.subr.bf16.mxu0 %v487
    %551 = vmatpush1.bf16.msra.mxu0 %v486
    %552 = vmatprep.subr.bf16.mxu0 %v489
    %553 = vmatpush1.bf16.msra.mxu0 %v488
    %554 = vmatprep.subr.bf16.mxu0 %v491
    %555 = vmatpush1.bf16.msra.mxu0 %v490
    %556 = vmatprep.subr.bf16.mxu0 %v493
    %557 = vmatpush1.bf16.msra.mxu0 %v492
    %558 = vmatprep.subr.bf16.mxu0 %v495
    %559 = vmatpush1.bf16.msra.mxu0 %v494
    %560 = vmatprep.subr.bf16.mxu0 %v497
    %561 = vmatpush1.bf16.msra.mxu0 %v496
    %562 = vmatprep.subr.bf16.mxu0 %v499
    %563 = vmatpush1.bf16.msra.mxu0 %v498
    %564 = vmatprep.mubr.bf16.mxu0 %v313
    %565 = vmatmul.mubr.bf16.gmra.mrb[0].mxu0 %v312
    %v566 = vpop.f32.mrb[0].mxu0
    %v567 = vadd.f32 %v365, %v566
    %v568 = vpop.f32.mrb[0].mxu0
    %v569 = vadd.f32 %v369, %v568
    %v570 = vpop.f32.mrb[0].mxu0
    %v571 = vadd.f32 %v365, %v570
    %v572 = vpop.f32.mrb[0].mxu0
    %v573 = vadd.f32 %v369, %v572
    %574 = vmatprep.mubr.bf16.mxu0 %v315
    %575 = vmatmul.mubr.bf16.gmra.mrb[0].mxu0 %v314
    %v576 = vpop.f32.mrb[0].mxu0
    %v577 = vadd.f32 %v365, %v576
    %v578 = vpop.f32.mrb[0].mxu0
    %v579 = vadd.f32 %v369, %v578
    %v580 = vpop.f32.mrb[0].mxu0
    %v581 = vadd.f32 %v365, %v580
    %v582 = vpop.f32.mrb[0].mxu0
    %v583 = vadd.f32 %v369, %v582
    %584 = vmatprep.mubr.bf16.mxu0 %v317
    %585 = vmatmul.mubr.bf16.gmra.mrb[0].mxu0 %v316
    %v586 = vpop.f32.mrb[0].mxu0
    %v587 = vadd.f32 %v365, %v586
    %v588 = vpop.f32.mrb[0].mxu0
    %v589 = vadd.f32 %v369, %v588
    %v590 = vpop.f32.mrb[0].mxu0
    %v591 = vadd.f32 %v365, %v590
    %v592 = vpop.f32.mrb[0].mxu0
    %v593 = vadd.f32 %v369, %v592
    %594 = vmatprep.mubr.bf16.mxu0 %v319
    %595 = vmatmul.mubr.bf16.gmra.mrb[0].mxu0 %v318
    %v596 = vpop.f32.mrb[0].mxu0
    %v597 = vadd.f32 %v365, %v596
    %v598 = vpop.f32.mrb[0].mxu0
    %v599 = vadd.f32 %v369, %v598
    %v600 = vpop.f32.mrb[0].mxu0
    %v601 = vadd.f32 %v365, %v600
    %v602 = vpop.f32.mrb[0].mxu0
    %v603 = vadd.f32 %v369, %v602
    %604 = vmatprep.mubr.bf16.mxu0 %v321
    %605 = vmatmul.mubr.bf16.gmra.mrb[0].mxu0 %v320
    %v606 = vpop.f32.mrb[0].mxu0
    %v607 = vadd.f32 %v365, %v606
    %v608 = vpop.f32.mrb[0].mxu0
    %v609 = vadd.f32 %v369, %v608
    %v610 = vpop.f32.mrb[0].mxu0
    %v611 = vadd.f32 %v365, %v610
    %v612 = vpop.f32.mrb[0].mxu0
    %v613 = vadd.f32 %v369, %v612
    %614 = vmatprep.mubr.bf16.mxu0 %v323
    %615 = vmatmul.mubr.bf16.gmra.mrb[0].mxu0 %v322
    %v616 = vpop.f32.mrb[0].mxu0
    %v617 = vadd.f32 %v365, %v616
    %v618 = vpop.f32.mrb[0].mxu0
    %v619 = vadd.f32 %v369, %v618
    %v620 = vpop.f32.mrb[0].mxu0
    %v621 = vadd.f32 %v365, %v620
    %v622 = vpop.f32.mrb[0].mxu0
    %v623 = vadd.f32 %v369, %v622
    %624 = vmatprep.mubr.bf16.mxu0 %v325
    %625 = vmatmul.mubr.bf16.gmra.mrb[0].mxu0 %v324
    %v626 = vpop.f32.mrb[0].mxu0
    %v627 = vadd.f32 %v365, %v626
    %v628 = vpop.f32.mrb[0].mxu0
    %v629 = vadd.f32 %v369, %v628
    %v630 = vpop.f32.mrb[0].mxu0
    %v631 = vadd.f32 %v365, %v630
    %v632 = vpop.f32.mrb[0].mxu0
    %v633 = vadd.f32 %v369, %v632
    %634 = vmatprep.mubr.bf16.mxu0 %v327
    %635 = vmatmul.mubr.bf16.gmra.mrb[0].mxu0 %v326
    %v636 = vpop.f32.mrb[0].mxu0
    %v637 = vadd.f32 %v365, %v636
    %v638 = vpop.f32.mrb[0].mxu0
    %v639 = vadd.f32 %v369, %v638
    %v640 = vpop.f32.mrb[0].mxu0
    %v641 = vadd.f32 %v365, %v640
    %v642 = vpop.f32.mrb[0].mxu0
    %v643 = vadd.f32 %v369, %v642
    %644 = vdwg.mxu0
    %v645 = vmax.f32 %v567, 0.0
    %v646 = vmax.f32 %v569, 0.0
    %v647 = vmax.f32 %v571, 0.0
    %v648 = vmax.f32 %v573, 0.0
    %v649 = vmax.f32 %v577, 0.0
    %v650 = vmax.f32 %v579, 0.0
    %v651 = vmax.f32 %v581, 0.0
    %v652 = vmax.f32 %v583, 0.0
    %v653 = vmax.f32 %v587, 0.0
    %v654 = vmax.f32 %v589, 0.0
    %v655 = vmax.f32 %v591, 0.0
    %v656 = vmax.f32 %v593, 0.0
    %v657 = vmax.f32 %v597, 0.0
    %v658 = vmax.f32 %v599, 0.0
    %v659 = vmax.f32 %v601, 0.0
    %v660 = vmax.f32 %v603, 0.0
    %v661 = vmax.f32 %v607, 0.0
    %v662 = vmax.f32 %v609, 0.0
    %v663 = vmax.f32 %v611, 0.0
    %v664 = vmax.f32 %v613, 0.0
    %v665 = vmax.f32 %v617, 0.0
    %v666 = vmax.f32 %v619, 0.0
    %v667 = vmax.f32 %v621, 0.0
    %v668 = vmax.f32 %v623, 0.0
    %v669 = vmax.f32 %v627, 0.0
    %v670 = vmax.f32 %v629, 0.0
    %v671 = vmax.f32 %v631, 0.0
    %v672 = vmax.f32 %v633, 0.0
    %v673 = vmax.f32 %v637, 0.0
    %v674 = vmax.f32 %v639, 0.0
    %v675 = vmax.f32 %v641, 0.0
    %v676 = vmax.f32 %v643, 0.0
    %v677 = vpack.c.bf16 %v647, %v645
    %v678 = vpack.c.bf16 %v648, %v646
    %v679 = vpack.c.bf16 %v651, %v649
    %v680 = vpack.c.bf16 %v652, %v650
    %v681 = vpack.c.bf16 %v655, %v653
    %v682 = vpack.c.bf16 %v656, %v654
    %v683 = vpack.c.bf16 %v659, %v657
    %v684 = vpack.c.bf16 %v660, %v658
    %v685 = vpack.c.bf16 %v663, %v661
    %v686 = vpack.c.bf16 %v664, %v662
    %v687 = vpack.c.bf16 %v667, %v665
    %v688 = vpack.c.bf16 %v668, %v666
    %v689 = vpack.c.bf16 %v671, %v669
    %v690 = vpack.c.bf16 %v672, %v670
    %v691 = vpack.c.bf16 %v675, %v673
    %v692 = vpack.c.bf16 %v676, %v674
    %v693 = vld [vmem:[#allocation5] sm:$0xf]
    %v694 = vld [vmem:[#allocation5 + $0x4] sm:$0xf]
    %v695 = vld [vmem:[#allocation5 + $0x8] sm:$0xf]
    %v696 = vld [vmem:[#allocation5 + $0xc] sm:$0xf]
    %v697 = vld [vmem:[#allocation5 + $0x10] sm:$0xf]
    %v698 = vld [vmem:[#allocation5 + $0x14] sm:$0xf]
    %v699 = vld [vmem:[#allocation5 + $0x18] sm:$0xf]
    %v700 = vld [vmem:[#allocation5 + $0x1c] sm:$0xf]
    %v701 = vld [vmem:[#allocation5 + $0x20] sm:$0xf]
    %v702 = vld [vmem:[#allocation5 + $0x24] sm:$0xf]
    %v703 = vld [vmem:[#allocation5 + $0x28] sm:$0xf]
    %v704 = vld [vmem:[#allocation5 + $0x2c] sm:$0xf]
    %v705 = vld [vmem:[#allocation5 + $0x30] sm:$0xf]
    %v706 = vld [vmem:[#allocation5 + $0x34] sm:$0xf]
    %v707 = vld [vmem:[#allocation5 + $0x38] sm:$0xf]
    %v708 = vld [vmem:[#allocation5 + $0x3c] sm:$0xf]
    %v709 = vld [vmem:[#allocation5 + $0x40] sm:$0xf]
    %v710 = vld [vmem:[#allocation5 + $0x44] sm:$0xf]
    %v711 = vld [vmem:[#allocation5 + $0x48] sm:$0xf]
    %v712 = vld [vmem:[#allocation5 + $0x4c] sm:$0xf]
    %v713 = vld [vmem:[#allocation5 + $0x50] sm:$0xf]
    %v714 = vld [vmem:[#allocation5 + $0x54] sm:$0xf]
    %v715 = vld [vmem:[#allocation5 + $0x58] sm:$0xf]
    %v716 = vld [vmem:[#allocation5 + $0x5c] sm:$0xf]
    %v717 = vld [vmem:[#allocation5 + $0x60] sm:$0xf]
    %v718 = vld [vmem:[#allocation5 + $0x64] sm:$0xf]
    %v719 = vld [vmem:[#allocation5 + $0x68] sm:$0xf]
    %v720 = vld [vmem:[#allocation5 + $0x6c] sm:$0xf]
    %v721 = vld [vmem:[#allocation5 + $0x70] sm:$0xf]
    %v722 = vld [vmem:[#allocation5 + $0x74] sm:$0xf]
    %v723 = vld [vmem:[#allocation5 + $0x78] sm:$0xf]
    %v724 = vld [vmem:[#allocation5 + $0x7c] sm:$0xf]
    %v725 = vld [vmem:[%s6] sm:$0x1]
    %v727 = vlaneseq
    %v728 = vshrl.u32 %v727, 7
    %v729 = vsub.s32 0, %v728
    %v730 = vrot.slane %v725, %v729
    %v764 = vunpack.c.l.b16 %v693
    %v765 = vunpack.c.l.b16 %v694
    %v766 = vunpack.c.l.b16 %v695
    %v767 = vunpack.c.l.b16 %v696
    %v768 = vunpack.c.l.b16 %v697
    %v769 = vunpack.c.l.b16 %v698
    %v770 = vunpack.c.l.b16 %v699
    %v771 = vunpack.c.l.b16 %v700
    %v772 = vunpack.c.l.b16 %v701
    %v773 = vunpack.c.l.b16 %v702
    %v774 = vunpack.c.l.b16 %v703
    %v775 = vunpack.c.l.b16 %v704
    %v776 = vunpack.c.l.b16 %v705
    %v777 = vunpack.c.l.b16 %v706
    %v778 = vunpack.c.l.b16 %v707
    %v779 = vunpack.c.l.b16 %v708
    %v780 = vunpack.c.l.b16 %v709
    %v781 = vunpack.c.l.b16 %v710
    %v782 = vunpack.c.l.b16 %v711
    %v783 = vunpack.c.l.b16 %v712
    %v784 = vunpack.c.l.b16 %v713
    %v785 = vunpack.c.l.b16 %v714
    %v786 = vunpack.c.l.b16 %v715
    %v787 = vunpack.c.l.b16 %v716
    %v788 = vunpack.c.l.b16 %v717
    %v789 = vunpack.c.l.b16 %v718
    %v790 = vunpack.c.l.b16 %v719
    %v791 = vunpack.c.l.b16 %v720
    %v792 = vunpack.c.l.b16 %v721
    %v793 = vunpack.c.l.b16 %v722
    %v794 = vunpack.c.l.b16 %v723
    %v795 = vunpack.c.l.b16 %v724
    %v796 = vpack.c.b16 %v765, %v764
    %v797 = vpack.c.b16 %v767, %v766
    %v798 = vpack.c.b16 %v769, %v768
    %v799 = vpack.c.b16 %v771, %v770
    %v800 = vpack.c.b16 %v773, %v772
    %v801 = vpack.c.b16 %v775, %v774
    %v802 = vpack.c.b16 %v777, %v776
    %v803 = vpack.c.b16 %v779, %v778
    %v804 = vpack.c.b16 %v781, %v780
    %v805 = vpack.c.b16 %v783, %v782
    %v806 = vpack.c.b16 %v785, %v784
    %v807 = vpack.c.b16 %v787, %v786
    %v808 = vpack.c.b16 %v789, %v788
    %v809 = vpack.c.b16 %v791, %v790
    %v810 = vpack.c.b16 %v793, %v792
    %v811 = vpack.c.b16 %v795, %v794
    %828 = vmatprep.subr.bf16.mxu0 0
    %829 = vmatpush1.bf16.msra.mxu0 %v796
    %830 = vmatprep.subr.bf16.mxu0 0
    %831 = vmatpush1.bf16.msra.mxu0 %v797
    %832 = vmatprep.subr.bf16.mxu0 0
    %833 = vmatpush1.bf16.msra.mxu0 %v798
    %834 = vmatprep.subr.bf16.mxu0 0
    %835 = vmatpush1.bf16.msra.mxu0 %v799
    %836 = vmatprep.subr.bf16.mxu0 0
    %837 = vmatpush1.bf16.msra.mxu0 %v800
    %838 = vmatprep.subr.bf16.mxu0 0
    %839 = vmatpush1.bf16.msra.mxu0 %v801
    %840 = vmatprep.subr.bf16.mxu0 0
    %841 = vmatpush1.bf16.msra.mxu0 %v802
    %842 = vmatprep.subr.bf16.mxu0 0
    %843 = vmatpush1.bf16.msra.mxu0 %v803
    %844 = vmatprep.subr.bf16.mxu0 0
    %845 = vmatpush1.bf16.msra.mxu0 %v804
    %846 = vmatprep.subr.bf16.mxu0 0
    %847 = vmatpush1.bf16.msra.mxu0 %v805
    %848 = vmatprep.subr.bf16.mxu0 0
    %849 = vmatpush1.bf16.msra.mxu0 %v806
    %850 = vmatprep.subr.bf16.mxu0 0
    %851 = vmatpush1.bf16.msra.mxu0 %v807
    %852 = vmatprep.subr.bf16.mxu0 0
    %853 = vmatpush1.bf16.msra.mxu0 %v808
    %854 = vmatprep.subr.bf16.mxu0 0
    %855 = vmatpush1.bf16.msra.mxu0 %v809
    %856 = vmatprep.subr.bf16.mxu0 0
    %857 = vmatpush1.bf16.msra.mxu0 %v810
    %858 = vmatprep.subr.bf16.mxu0 0
    %859 = vmatpush1.bf16.msra.mxu0 %v811
    %860 = vmatprep.mubr.bf16.mxu0 %v678
    %861 = vmatmul.mubr.bf16.gmra.mrb[0].mxu0 %v677
    %v862 = vpop.f32.mrb[0].mxu0
    %v863 = vadd.f32 %v730, %v862
    %v864 = vpop.f32.mrb[0].mxu0
    %v865 = vpop.f32.mrb[0].mxu0
    %v866 = vadd.f32 %v730, %v865
    %v867 = vpop.f32.mrb[0].mxu0
    %868 = vmatprep.mubr.bf16.mxu0 %v680
    %869 = vmatmul.mubr.bf16.gmra.mrb[0].mxu0 %v679
    %v870 = vpop.f32.mrb[0].mxu0
    %v871 = vadd.f32 %v730, %v870
    %v872 = vpop.f32.mrb[0].mxu0
    %v873 = vpop.f32.mrb[0].mxu0
    %v874 = vadd.f32 %v730, %v873
    %v875 = vpop.f32.mrb[0].mxu0
    %876 = vmatprep.mubr.bf16.mxu0 %v682
    %877 = vmatmul.mubr.bf16.gmra.mrb[0].mxu0 %v681
    %v878 = vpop.f32.mrb[0].mxu0
    %v879 = vadd.f32 %v730, %v878
    %v880 = vpop.f32.mrb[0].mxu0
    %v881 = vpop.f32.mrb[0].mxu0
    %v882 = vadd.f32 %v730, %v881
    %v883 = vpop.f32.mrb[0].mxu0
    %884 = vmatprep.mubr.bf16.mxu0 %v684
    %885 = vmatmul.mubr.bf16.gmra.mrb[0].mxu0 %v683
    %v886 = vpop.f32.mrb[0].mxu0
    %v887 = vadd.f32 %v730, %v886
    %v888 = vpop.f32.mrb[0].mxu0
    %v889 = vpop.f32.mrb[0].mxu0
    %v890 = vadd.f32 %v730, %v889
    %v891 = vpop.f32.mrb[0].mxu0
    %892 = vmatprep.mubr.bf16.mxu0 %v686
    %893 = vmatmul.mubr.bf16.gmra.mrb[0].mxu0 %v685
    %v894 = vpop.f32.mrb[0].mxu0
    %v895 = vadd.f32 %v730, %v894
    %v896 = vpop.f32.mrb[0].mxu0
    %v897 = vpop.f32.mrb[0].mxu0
    %v898 = vadd.f32 %v730, %v897
    %v899 = vpop.f32.mrb[0].mxu0
    %900 = vmatprep.mubr.bf16.mxu0 %v688
    %901 = vmatmul.mubr.bf16.gmra.mrb[0].mxu0 %v687
    %v902 = vpop.f32.mrb[0].mxu0
    %v903 = vadd.f32 %v730, %v902
    %v904 = vpop.f32.mrb[0].mxu0
    %v905 = vpop.f32.mrb[0].mxu0
    %v906 = vadd.f32 %v730, %v905
    %v907 = vpop.f32.mrb[0].mxu0
    %908 = vmatprep.mubr.bf16.mxu0 %v690
    %909 = vmatmul.mubr.bf16.gmra.mrb[0].mxu0 %v689
    %v910 = vpop.f32.mrb[0].mxu0
    %v911 = vadd.f32 %v730, %v910
    %v912 = vpop.f32.mrb[0].mxu0
    %v913 = vpop.f32.mrb[0].mxu0
    %v914 = vadd.f32 %v730, %v913
    %v915 = vpop.f32.mrb[0].mxu0
    %916 = vmatprep.mubr.bf16.mxu0 %v692
    %917 = vmatmul.mubr.bf16.gmra.mrb[0].mxu0 %v691
    %v918 = vpop.f32.mrb[0].mxu0
    %v919 = vadd.f32 %v730, %v918
    %v920 = vpop.f32.mrb[0].mxu0
    %v921 = vpop.f32.mrb[0].mxu0
    %v922 = vadd.f32 %v730, %v921
    %v923 = vpop.f32.mrb[0].mxu0
    %924 = vdwg.mxu0
    %v925 = vld [vmem:[%s7] sm:$0x1]
    %v926 = vtanh.pop %v863
    %v927 = vtanh.pop %v866
    %v928 = vtanh.pop %v871
    %v929 = vtanh.pop %v874
    %v930 = vtanh.pop %v879
    %v931 = vtanh.pop %v882
    %v932 = vtanh.pop %v887
    %v933 = vtanh.pop %v890
    %v934 = vtanh.pop %v895
    %v935 = vtanh.pop %v898
    %v936 = vtanh.pop %v903
    %v937 = vtanh.pop %v906
    %v938 = vtanh.pop %v911
    %v939 = vtanh.pop %v914
    %v940 = vtanh.pop %v919
    %v941 = vtanh.pop %v922
    %v943 = vlaneseq
    %v944 = vshrl.u32 %v943, 7
    %v945 = vsub.s32 0, %v944
    %v946 = vrot.slane %v925, %v945
    %v948 = vmul.f32 %v946, %v926
    %v949 = vmul.f32 %v946, %v927
    %v950 = vmul.f32 %v946, %v928
    %v951 = vmul.f32 %v946, %v929
    %v952 = vmul.f32 %v946, %v930
    %v953 = vmul.f32 %v946, %v931
    %v954 = vmul.f32 %v946, %v932
    %v955 = vmul.f32 %v946, %v933
    %v956 = vmul.f32 %v946, %v934
    %v957 = vmul.f32 %v946, %v935
    %v958 = vmul.f32 %v946, %v936
    %v959 = vmul.f32 %v946, %v937
    %v960 = vmul.f32 %v946, %v938
    %v961 = vmul.f32 %v946, %v939
    %v962 = vmul.f32 %v946, %v940
    %v963 = vmul.f32 %v946, %v941
    %v964 = vld [vmem:[%s8] sm:$0x1]
    %v966 = vlaneseq
    %v967 = vshrl.u32 %v966, 7
    %v968 = vsub.s32 0, %v967
    %v969 = vrot.slane %v964, %v968
    %v971 = vadd.f32 %v948, %v969
    %v972 = vadd.f32 %v949, %v969
    %v973 = vadd.f32 %v950, %v969
    %v974 = vadd.f32 %v951, %v969
    %v975 = vadd.f32 %v952, %v969
    %v976 = vadd.f32 %v953, %v969
    %v977 = vadd.f32 %v954, %v969
    %v978 = vadd.f32 %v955, %v969
    %v979 = vadd.f32 %v956, %v969
    %v980 = vadd.f32 %v957, %v969
    %v981 = vadd.f32 %v958, %v969
    %v982 = vadd.f32 %v959, %v969
    %v983 = vadd.f32 %v960, %v969
    %v984 = vadd.f32 %v961, %v969
    %v985 = vadd.f32 %v962, %v969
    %v986 = vadd.f32 %v963, %v969
    %987 = vst [vmem:[#allocation7] sm:$0xff] %v971
    %988 = vst [vmem:[#allocation7 + $0x8] sm:$0xff] %v972
    %989 = vst [vmem:[#allocation7 + $0x10] sm:$0xff] %v973
    %990 = vst [vmem:[#allocation7 + $0x18] sm:$0xff] %v974
    %991 = vst [vmem:[#allocation7 + $0x20] sm:$0xff] %v975
    %992 = vst [vmem:[#allocation7 + $0x28] sm:$0xff] %v976
    %993 = vst [vmem:[#allocation7 + $0x30] sm:$0xff] %v977
    %994 = vst [vmem:[#allocation7 + $0x38] sm:$0xff] %v978
    %995 = vst [vmem:[#allocation7 + $0x40] sm:$0xff] %v979
    %996 = vst [vmem:[#allocation7 + $0x48] sm:$0xff] %v980
    %997 = vst [vmem:[#allocation7 + $0x50] sm:$0xff] %v981
    %998 = vst [vmem:[#allocation7 + $0x58] sm:$0xff] %v982
    %999 = vst [vmem:[#allocation7 + $0x60] sm:$0xff] %v983
    %1000 = vst [vmem:[#allocation7 + $0x68] sm:$0xff] %v984
    %1001 = vst [vmem:[#allocation7 + $0x70] sm:$0xff] %v985
    %1002 = vst [vmem:[#allocation7 + $0x78] sm:$0xff] %v986
    // Predicated region
    $region46: #{tpu_custom_call.1} parent=1 // pred_check
      _
    $region47: #{tpu_custom_call.1} parent=1 // pred_check_branch
      %1004 = sbr.rel (0) target = $region49
    $region48: #{tpu_custom_call.1} parent=1 // pred_region
      %s1006 = ssub.s32 2048, 2048
      %1007 = vsyncadd [#allocation4], %s1006
      %s1008 = sshll.u32 [#allocation7], 4
      %s1009 = int_to_ptr.vmem [resolvable:$true] %s1008
      %1014 = dma.vmem_to_hbm [thread:$0]  %s1009, 2048, %s9, [#allocation4], 128, 128, 8
    $region49: #{tpu_custom_call.1} parent=1 // pred_fallthru
      _
    // Predicated region
    $region50: #{tpu_custom_call.1} parent=1 // pred_check
      _
    $region51: #{tpu_custom_call.1} parent=1 // pred_check_branch
      %1016 = sbr.rel (0) target = $region53
    $region52: #{tpu_custom_call.1} parent=1 // pred_region
      %1017 = dma.done [#allocation4], 2048
    $region53: #{tpu_custom_call.1} parent=1 // pred_fallthru
      _
    %1018 = vsyncpa [#allocation3], 1
    %1019 = vsyncpa [#allocation6], 1
    %1020 = vsyncpa [#allocation4], 1

</llo_original>
